<compile_context>
chip_gen: v6e
topology: v6e:2x2x1
jax: 0.10.0
libtpu: 0.0.40
codegen_flags: <defaults>
</compile_context>

<pallas_src>
import jax
import jax.numpy as jnp
from jax import lax
from jax.experimental import pallas as pl
from jax.experimental.pallas import tpu as pltpu

HIDDEN = 64      # feature width of the module
PACK = 2         # logical rows packed per lane-dense row (64 -> 128 lanes)
LN_EPS = 1e-5


def parallel_linears_kernel(x_ref, w_ref, b_ref, g_ref, beta_ref, o_ref):
    # x_ref: (tile, 128) -- PACK logical rows packed along lanes.
    x = x_ref[...]

    # One fused MXU pass over the block-diagonal packed RHS:
    #   s = [y_a | y_b | z_a | z_b]   -> (tile, 256), f32 accumulation.
    s = jnp.dot(x, w_ref[...], preferred_element_type=jnp.float32)
    s = s + b_ref[...]

    y = s[:, : PACK * HIDDEN]   # (tile, 128): fc1 of both packed rows (vreg-aligned slice)
    z = s[:, PACK * HIDDEN:]    # (tile, 128): fc2 of both packed rows

    # Per-64-lane-segment LayerNorm stats, one pass (E[y], E[y^2]).
    # Full-width XLU reductions + a masked copy give both segments' sums.
    lane = lax.broadcasted_iota(jnp.int32, y.shape, 1)
    in_seg_a = lane < HIDDEN
    inv_n = jnp.float32(1.0 / HIDDEN)

    sum_all = jnp.sum(y, axis=-1, keepdims=True)
    sum_a = jnp.sum(jnp.where(in_seg_a, y, 0.0), axis=-1, keepdims=True)
    sum_b = sum_all - sum_a

    y2 = y * y
    sumsq_all = jnp.sum(y2, axis=-1, keepdims=True)
    sumsq_a = jnp.sum(jnp.where(in_seg_a, y2, 0.0), axis=-1, keepdims=True)
    sumsq_b = sumsq_all - sumsq_a

    mean = jnp.where(in_seg_a, sum_a, sum_b) * inv_n
    mean_sq = jnp.where(in_seg_a, sumsq_a, sumsq_b) * inv_n
    var = mean_sq - mean * mean

    y = (y - mean) * lax.rsqrt(var + LN_EPS)
    y = y * g_ref[...] + beta_ref[...]   # affine ([gamma|gamma], [beta|beta])
    y = jnp.maximum(y, 0.0)              # ReLU

    o_ref[...] = (y + z).astype(o_ref.dtype)


def parallel_linears(x, w1, b1, w2, b2, gamma, beta, *, tile_rows=2048):
    """x: (B, 64). w1, w2: (64, 64) in PyTorch (out, in) convention.
    b1, b2, gamma, beta: (64,)."""
    B, D = x.shape
    assert D == HIDDEN

    # ---- Wrapper-side layout plumbing: lane-dense 128-wide slabs ----
    pad_rows = (-B) % PACK
    if pad_rows:
        x = jnp.concatenate([x, jnp.zeros((pad_rows, D), x.dtype)], axis=0)
    B2 = (B + pad_rows) // PACK
    x2 = x.reshape(B2, PACK * D)                     # contiguous reshape (free)

    tile = min(tile_rows, B2)                        # multiple of 8, or the full dim
    pad2 = (-B2) % tile
    if pad2:
        x2 = jnp.concatenate([x2, jnp.zeros((pad2, PACK * D), x2.dtype)], axis=0)
    B2p = B2 + pad2

    # Block-diagonal fused RHS, column layout -> s = [y_a | y_b | z_a | z_b].
    w1t = w1.T.astype(x.dtype)                       # (64, 64), cols = fc1 outputs
    w2t = w2.T.astype(x.dtype)
    zero = jnp.zeros_like(w1t)
    w_big = jnp.concatenate(
        [jnp.concatenate([w1t, zero, w2t, zero], axis=1),    # rows 0:64   (row_a inputs)
         jnp.concatenate([zero, w1t, zero, w2t], axis=1)],   # rows 64:128 (row_b inputs)
        axis=0)                                              # (128, 256)
    b_big = jnp.concatenate([b1, b1, b2, b2]).reshape(1, 2 * PACK * D).astype(jnp.float32)
    g_big = jnp.concatenate([gamma, gamma]).reshape(1, PACK * D).astype(jnp.float32)
    beta_big = jnp.concatenate([beta, beta]).reshape(1, PACK * D).astype(jnp.float32)

    itemsize = jnp.dtype(x.dtype).itemsize
    cost = pl.CostEstimate(
        flops=2 * B2p * (PACK * D) * (2 * PACK * D) + 24 * B2p * PACK * D,
        transcendentals=B2p * PACK,                          # one rsqrt per logical row
        bytes_accessed=2 * B2p * PACK * D * itemsize
        + (PACK * D) * (2 * PACK * D) * itemsize + 4 * PACK * D * 4,
    )

    out2 = pl.pallas_call(
        parallel_linears_kernel,
        out_shape=jax.ShapeDtypeStruct((B2p, PACK * D), x.dtype),
        grid=(B2p // tile,),
        in_specs=[
            pl.BlockSpec((tile, PACK * D), lambda i: (i, 0)),        # x tile (pipelined)
            pl.BlockSpec((PACK * D, 2 * PACK * D), lambda i: (0, 0)),  # fused weights (pinned)
            pl.BlockSpec((1, 2 * PACK * D), lambda i: (0, 0)),       # fused biases  (pinned)
            pl.BlockSpec((1, PACK * D), lambda i: (0, 0)),           # gamma|gamma   (pinned)
            pl.BlockSpec((1, PACK * D), lambda i: (0, 0)),           # beta|beta     (pinned)
        ],
        out_specs=pl.BlockSpec((tile, PACK * D), lambda i: (i, 0)),  # lane-dense output
        compiler_params=pltpu.CompilerParams(
            dimension_semantics=("parallel",),
            vmem_limit_bytes=32 * 1024 * 1024,
        ),
        cost_estimate=cost,
    )(x2, w_big, b_big, g_big, beta_big)

    # Unpack lanes back to (B, 64) (contiguous reshape + slice of the pad rows).
    return out2.reshape(B2p * PACK, D)[:B]


def reference(x, w1, b1, w2, b2, gamma, beta):
    y = x @ w1.T + b1
    mean = jnp.mean(y, axis=-1, keepdims=True)
    var = jnp.mean(jnp.square(y - mean), axis=-1, keepdims=True)
    y = (y - mean) / jnp.sqrt(var + LN_EPS)
    y = y * gamma + beta
    y = jnp.maximum(y, 0.0)
    z = x @ w2.T + b2
    return y + z


if __name__ == "__main__":
    key = jax.random.PRNGKey(0)
    kx, kw1, kb1, kw2, kb2, kg, kb = jax.random.split(key, 7)

    B = 16  # small test batch; production batches use tile_rows=2048 packed-row tiles
    x = jax.random.normal(kx, (B, HIDDEN), dtype=jnp.float32)

    # Deterministic parameters matching the module's shapes (both Linears have bias).
    w1 = jax.random.normal(kw1, (HIDDEN, HIDDEN), dtype=jnp.float32) * 0.1
    b1 = jax.random.normal(kb1, (HIDDEN,), dtype=jnp.float32) * 0.1
    w2 = jax.random.normal(kw2, (HIDDEN, HIDDEN), dtype=jnp.float32) * 0.1
    b2 = jax.random.normal(kb2, (HIDDEN,), dtype=jnp.float32) * 0.1
    gamma = 1.0 + 0.1 * jax.random.normal(kg, (HIDDEN,), dtype=jnp.float32)
    beta = 0.1 * jax.random.normal(kb, (HIDDEN,), dtype=jnp.float32)

    out = parallel_linears(x, w1, b1, w2, b2, gamma, beta)
    out = jax.block_until_ready(out)

    ref = reference(x, w1, b1, w2, b2, gamma, beta)
    assert out.shape == ref.shape, "shape mismatch vs reference"
    assert jnp.allclose(out, ref, atol=1e-4, rtol=1e-4), "mismatch vs reference"

    print("KERNEL_OK")
</pallas_src>

<mosaic_0001>
module attributes {stable_mosaic.version = 11 : i64} {
  func.func @parallel_linears_kernel(%arg0: i32, %arg1: memref<8x128xf32, #tpu.memory_space<vmem>>, %arg2: memref<128x256xf32, #tpu.memory_space<vmem>>, %arg3: memref<1x256xf32, #tpu.memory_space<vmem>>, %arg4: memref<1x128xf32, #tpu.memory_space<vmem>>, %arg5: memref<1x128xf32, #tpu.memory_space<vmem>>, %arg6: memref<8x128xf32, #tpu.memory_space<vmem>>) attributes {dimension_semantics = [#tpu.dimension_semantics<parallel>], iteration_bounds = array<i64: 1>, scalar_prefetch = 0 : i64, scratch_operands = 0 : i64, tpu.core_type = #tpu.core_type<tc>, window_params = [{transform_indices = @transform_0, window_bounds = array<i64: 8, 128>}, {pipeline_mode = #tpu.pipeline_mode<synchronous>, transform_indices = @transform_1, window_bounds = array<i64: 128, 256>}, {pipeline_mode = #tpu.pipeline_mode<synchronous>, transform_indices = @transform_2, window_bounds = array<i64: 1, 256>}, {pipeline_mode = #tpu.pipeline_mode<synchronous>, transform_indices = @transform_3, window_bounds = array<i64: 1, 128>}, {pipeline_mode = #tpu.pipeline_mode<synchronous>, transform_indices = @transform_4, window_bounds = array<i64: 1, 128>}, {transform_indices = @transform_5, window_bounds = array<i64: 8, 128>}]} {
    %c0 = arith.constant 0 : index
    %c0_0 = arith.constant 0 : index
    %0 = vector.load %arg1[%c0, %c0_0] : memref<8x128xf32, #tpu.memory_space<vmem>>, vector<8x128xf32>
    %c0_1 = arith.constant 0 : index
    %c0_2 = arith.constant 0 : index
    %1 = vector.load %arg2[%c0_1, %c0_2] : memref<128x256xf32, #tpu.memory_space<vmem>>, vector<128x256xf32>
    %cst = arith.constant dense<0.000000e+00> : vector<8x256xf32>
    %2 = tpu.matmul %0, %1, %cst {dimension_numbers = #tpu.dot_dimension_numbers<[1], [0], [0], [1], [0, 0, 1, 1], [], []>} : vector<8x128xf32>, vector<128x256xf32>, vector<8x256xf32> -> vector<8x256xf32>
    %c0_3 = arith.constant 0 : index
    %c0_4 = arith.constant 0 : index
    %3 = vector.load %arg3[%c0_3, %c0_4] : memref<1x256xf32, #tpu.memory_space<vmem>>, vector<1x256xf32>
    %4 = vector.broadcast %3 : vector<1x256xf32> to vector<8x256xf32>
    %5 = arith.addf %2, %4 : vector<8x256xf32>
    %6 = vector.extract_strided_slice %5 {offsets = [0, 0], sizes = [8, 128], strides = [1, 1]} : vector<8x256xf32> to vector<8x128xf32>
    %7 = vector.extract_strided_slice %5 {offsets = [0, 128], sizes = [8, 128], strides = [1, 1]} : vector<8x256xf32> to vector<8x128xf32>
    %8 = tpu.iota {dimensions = array<i32: 1>} : vector<8x128xi32>
    %c64_i32 = arith.constant 64 : i32
    %9 = vector.broadcast %c64_i32 : i32 to vector<8x128xi32>
    %10 = arith.cmpi slt, %8, %9 : vector<8x128xi32>
    %cst_5 = arith.constant dense<0.000000e+00> : vector<8xf32>
    %11 = vector.multi_reduction <add>, %6, %cst_5 [1] : vector<8x128xf32> to vector<8xf32>
    %12 = vector.shape_cast %11 : vector<8xf32> to vector<8x1xf32>
    %cst_6 = arith.constant 0.000000e+00 : f32
    %13 = vector.broadcast %cst_6 : f32 to vector<8x128xf32>
    %14 = arith.select %10, %6, %13 : vector<8x128xi1>, vector<8x128xf32>
    %cst_7 = arith.constant dense<0.000000e+00> : vector<8xf32>
    %15 = vector.multi_reduction <add>, %14, %cst_7 [1] : vector<8x128xf32> to vector<8xf32>
    %16 = vector.shape_cast %15 : vector<8xf32> to vector<8x1xf32>
    %17 = arith.subf %12, %16 : vector<8x1xf32>
    %18 = arith.mulf %6, %6 : vector<8x128xf32>
    %cst_8 = arith.constant dense<0.000000e+00> : vector<8xf32>
    %19 = vector.multi_reduction <add>, %18, %cst_8 [1] : vector<8x128xf32> to vector<8xf32>
    %20 = vector.shape_cast %19 : vector<8xf32> to vector<8x1xf32>
    %cst_9 = arith.constant 0.000000e+00 : f32
    %21 = vector.broadcast %cst_9 : f32 to vector<8x128xf32>
    %22 = arith.select %10, %18, %21 : vector<8x128xi1>, vector<8x128xf32>
    %cst_10 = arith.constant dense<0.000000e+00> : vector<8xf32>
    %23 = vector.multi_reduction <add>, %22, %cst_10 [1] : vector<8x128xf32> to vector<8xf32>
    %24 = vector.shape_cast %23 : vector<8xf32> to vector<8x1xf32>
    %25 = arith.subf %20, %24 : vector<8x1xf32>
    %26 = vector.shape_cast %16 : vector<8x1xf32> to vector<8x1xf32>
    %27 = vector.broadcast %26 : vector<8x1xf32> to vector<8x128xf32>
    %28 = vector.shape_cast %17 : vector<8x1xf32> to vector<8x1xf32>
    %29 = vector.broadcast %28 : vector<8x1xf32> to vector<8x128xf32>
    %30 = arith.select %10, %27, %29 : vector<8x128xi1>, vector<8x128xf32>
    %cst_11 = arith.constant 1.562500e-02 : f32
    %31 = vector.broadcast %cst_11 : f32 to vector<8x128xf32>
    %32 = arith.mulf %30, %31 : vector<8x128xf32>
    %33 = vector.shape_cast %24 : vector<8x1xf32> to vector<8x1xf32>
    %34 = vector.broadcast %33 : vector<8x1xf32> to vector<8x128xf32>
    %35 = vector.shape_cast %25 : vector<8x1xf32> to vector<8x1xf32>
    %36 = vector.broadcast %35 : vector<8x1xf32> to vector<8x128xf32>
    %37 = arith.select %10, %34, %36 : vector<8x128xi1>, vector<8x128xf32>
    %cst_12 = arith.constant 1.562500e-02 : f32
    %38 = vector.broadcast %cst_12 : f32 to vector<8x128xf32>
    %39 = arith.mulf %37, %38 : vector<8x128xf32>
    %40 = arith.mulf %32, %32 : vector<8x128xf32>
    %41 = arith.subf %39, %40 : vector<8x128xf32>
    %42 = arith.subf %6, %32 : vector<8x128xf32>
    %cst_13 = arith.constant 9.99999974E-6 : f32
    %43 = vector.broadcast %cst_13 : f32 to vector<8x128xf32>
    %44 = arith.addf %41, %43 : vector<8x128xf32>
    %45 = math.rsqrt %44 : vector<8x128xf32>
    %46 = arith.mulf %42, %45 : vector<8x128xf32>
    %c0_14 = arith.constant 0 : index
    %c0_15 = arith.constant 0 : index
    %47 = vector.load %arg4[%c0_14, %c0_15] : memref<1x128xf32, #tpu.memory_space<vmem>>, vector<1x128xf32>
    %48 = vector.broadcast %47 : vector<1x128xf32> to vector<8x128xf32>
    %49 = arith.mulf %46, %48 : vector<8x128xf32>
    %c0_16 = arith.constant 0 : index
    %c0_17 = arith.constant 0 : index
    %50 = vector.load %arg5[%c0_16, %c0_17] : memref<1x128xf32, #tpu.memory_space<vmem>>, vector<1x128xf32>
    %51 = vector.broadcast %50 : vector<1x128xf32> to vector<8x128xf32>
    %52 = arith.addf %49, %51 : vector<8x128xf32>
    %cst_18 = arith.constant 0.000000e+00 : f32
    %53 = vector.broadcast %cst_18 : f32 to vector<8x128xf32>
    %54 = arith.maximumf %52, %53 : vector<8x128xf32>
    %55 = arith.addf %54, %7 : vector<8x128xf32>
    %c0_19 = arith.constant 0 : index
    %c0_20 = arith.constant 0 : index
    %56 = vector.load %arg6[%c0_19, %c0_20] : memref<8x128xf32, #tpu.memory_space<vmem>>, vector<8x128xf32>
    tpu.vector_store %arg6[%c0_19, %c0_20], %55 {strides = array<i32>} : memref<8x128xf32, #tpu.memory_space<vmem>>, vector<8x128xf32>,
    return
  }
  func.func @transform_0(%arg0: i32) -> (i32, i32) {
    %c0_i32 = arith.constant 0 : i32
    %c0_i32_0 = arith.constant 0 : i32
    return %arg0, %c0_i32 : i32, i32
  }
  func.func @transform_1(%arg0: i32) -> (i32, i32) {
    %c0_i32 = arith.constant 0 : i32
    %c0_i32_0 = arith.constant 0 : i32
    %c0_i32_1 = arith.constant 0 : i32
    return %c0_i32, %c0_i32_0 : i32, i32
  }
  func.func @transform_2(%arg0: i32) -> (i32, i32) {
    %c0_i32 = arith.constant 0 : i32
    %c0_i32_0 = arith.constant 0 : i32
    %c0_i32_1 = arith.constant 0 : i32
    return %c0_i32, %c0_i32_0 : i32, i32
  }
  func.func @transform_3(%arg0: i32) -> (i32, i32) {
    %c0_i32 = arith.constant 0 : i32
    %c0_i32_0 = arith.constant 0 : i32
    %c0_i32_1 = arith.constant 0 : i32
    return %c0_i32, %c0_i32_0 : i32, i32
  }
  func.func @transform_4(%arg0: i32) -> (i32, i32) {
    %c0_i32 = arith.constant 0 : i32
    %c0_i32_0 = arith.constant 0 : i32
    %c0_i32_1 = arith.constant 0 : i32
    return %c0_i32, %c0_i32_0 : i32, i32
  }
  func.func @transform_5(%arg0: i32) -> (i32, i32) {
    %c0_i32 = arith.constant 0 : i32
    %c0_i32_0 = arith.constant 0 : i32
    return %arg0, %c0_i32 : i32, i32
  }
}

</mosaic_0001>

<llo_original>
// kernel: tpu_custom_call.1
$region0: #{tpu_custom_call.1}
  #allocation0 [shape = 'u32[]', space=smem, size = 0x4, offset = 0x4, fixed_abs, tag = 'smem constant byte address 0x4 - core index']
  #allocation1 [shape = 'u32[144,128]{1,0:T(1,128)}', space=vmem, size = 0x12000, scoped, tag = 'internal scratch']
  %s0 = inlined_call_operand.hbm [shape: f32[8,128], index: 0, kind: input, shape index: {}]
  %s1 = inlined_call_operand.hbm [shape: f32[128,256], index: 1, kind: input, shape index: {}]
  %s2 = inlined_call_operand.vmem [shape: f32[1,256], index: 2, kind: input, shape index: {}]
  %s3 = inlined_call_operand.vmem [shape: f32[1,128], index: 3, kind: input, shape index: {}]
  %s4 = inlined_call_operand.vmem [shape: f32[1,128], index: 4, kind: input, shape index: {}]
  %s5 = inlined_call_operand.hbm [shape: f32[8,128], index: 5, kind: output, shape index: {}]
  %s6 = sld [smem:[#allocation0]]
  $region38: #{tpu_custom_call.1} parent=0
    _
  %s8 = ssub.s32 1, %s6
  %s9 = scalar_select 0, %s8, %s6
  $region1: #{tpu_custom_call.1} parent=0
    #allocation2 [shape = 'u8[4096]{0}', space=vmem, size = 0x1000, scoped, tag = 'input window, operand 0, single buffered']
    #allocation3 [shape = 's32[1]{0}', space=sflag, size = 0x4, scoped, tag = 'scoped memory for tpu_custom_call.1']
    #allocation4 [shape = 's32[1]{0}', space=sflag, size = 0x4, scoped, tag = 'scoped memory for tpu_custom_call.1']
    #allocation5 [shape = 'u8[131072]{0}', space=vmem, size = 0x20000, scoped, tag = 'input window, operand 1, single buffered']
    #allocation6 [shape = 's32[1]{0}', space=sflag, size = 0x4, scoped, tag = 'scoped memory for tpu_custom_call.1']
    #allocation7 [shape = 'u8[4096]{0}', space=vmem, size = 0x1000, scoped, tag = 'output window, operand 0, single buffered']
    %10 = vsyncpa [#allocation3], 0
    %11 = vsyncpa [#allocation6], 0
    %12 = vsyncpa [#allocation4], 0
    // Predicated region
    $region2: #{tpu_custom_call.1} parent=1 // pred_check
      _
    $region3: #{tpu_custom_call.1} parent=1 // pred_check_branch
      %14 = sbr.rel (0) target = $region5
    $region4: #{tpu_custom_call.1} parent=1 // pred_region
      %s16 = ssub.s32 128, 128
      %17 = vsyncadd [#allocation3], %s16
      %s19 = sshll.u32 [#allocation2], 4
      %s20 = int_to_ptr.vmem [resolvable:$true] %s19
      %22 = dma.hbm_to_vmem [thread:$0]  %s0, 128, %s20, [#allocation3]
    $region5: #{tpu_custom_call.1} parent=1 // pred_fallthru
      _
    // Predicated region
    $region6: #{tpu_custom_call.1} parent=1 // pred_check
      _
    $region7: #{tpu_custom_call.1} parent=1 // pred_check_branch
      %24 = sbr.rel (0) target = $region9
    $region8: #{tpu_custom_call.1} parent=1 // pred_region
      %s26 = ssub.s32 4096, 4096
      %27 = vsyncadd [#allocation6], %s26
      %s28 = sshll.u32 [#allocation5], 4
      %s29 = int_to_ptr.vmem [resolvable:$true] %s28
      %34 = dma.hbm_to_vmem [thread:$0]  %s1, 4096, %s29, [#allocation6], 256, 256, 16
    $region9: #{tpu_custom_call.1} parent=1 // pred_fallthru
      _
    // Predicated region
    $region10: #{tpu_custom_call.1} parent=1 // pred_check
      _
    $region11: #{tpu_custom_call.1} parent=1 // pred_check_branch
      %36 = sbr.rel (0) target = $region13
    $region12: #{tpu_custom_call.1} parent=1 // pred_region
      _
    $region13: #{tpu_custom_call.1} parent=1 // pred_fallthru
      _
    // Predicated region
    $region14: #{tpu_custom_call.1} parent=1 // pred_check
      _
    $region15: #{tpu_custom_call.1} parent=1 // pred_check_branch
      %38 = sbr.rel (0) target = $region17
    $region16: #{tpu_custom_call.1} parent=1 // pred_region
      _
    $region17: #{tpu_custom_call.1} parent=1 // pred_fallthru
      _
    // Predicated region
    $region18: #{tpu_custom_call.1} parent=1 // pred_check
      _
    $region19: #{tpu_custom_call.1} parent=1 // pred_check_branch
      %40 = sbr.rel (0) target = $region21
    $region20: #{tpu_custom_call.1} parent=1 // pred_region
      _
    $region21: #{tpu_custom_call.1} parent=1 // pred_fallthru
      _
    // Predicated region
    $region22: #{tpu_custom_call.1} parent=1 // pred_check
      _
    $region23: #{tpu_custom_call.1} parent=1 // pred_check_branch
      %42 = sbr.rel (0) target = $region25
    $region24: #{tpu_custom_call.1} parent=1 // pred_region
      %43 = dma.done [#allocation3], 128
    $region25: #{tpu_custom_call.1} parent=1 // pred_fallthru
      _
    // Predicated region
    $region26: #{tpu_custom_call.1} parent=1 // pred_check
      _
    $region27: #{tpu_custom_call.1} parent=1 // pred_check_branch
      %45 = sbr.rel (0) target = $region29
    $region28: #{tpu_custom_call.1} parent=1 // pred_region
      %46 = dma.done [#allocation6], 4096
    $region29: #{tpu_custom_call.1} parent=1 // pred_fallthru
      _
    %v47 = vld [vmem:[#allocation2] sm:$0xff]
    %v48 = vld [vmem:[#allocation5] sm:$0xff]
    %v49 = vld [vmem:[#allocation5 + $0x8] sm:$0xff]
    %v50 = vld [vmem:[#allocation5 + $0x10] sm:$0xff]
    %v51 = vld [vmem:[#allocation5 + $0x18] sm:$0xff]
    %v52 = vld [vmem:[#allocation5 + $0x20] sm:$0xff]
    %v53 = vld [vmem:[#allocation5 + $0x28] sm:$0xff]
    %v54 = vld [vmem:[#allocation5 + $0x30] sm:$0xff]
    %v55 = vld [vmem:[#allocation5 + $0x38] sm:$0xff]
    %v56 = vld [vmem:[#allocation5 + $0x40] sm:$0xff]
    %v57 = vld [vmem:[#allocation5 + $0x48] sm:$0xff]
    %v58 = vld [vmem:[#allocation5 + $0x50] sm:$0xff]
    %v59 = vld [vmem:[#allocation5 + $0x58] sm:$0xff]
    %v60 = vld [vmem:[#allocation5 + $0x60] sm:$0xff]
    %v61 = vld [vmem:[#allocation5 + $0x68] sm:$0xff]
    %v62 = vld [vmem:[#allocation5 + $0x70] sm:$0xff]
    %v63 = vld [vmem:[#allocation5 + $0x78] sm:$0xff]
    %v64 = vld [vmem:[#allocation5 + $0x80] sm:$0xff]
    %v65 = vld [vmem:[#allocation5 + $0x88] sm:$0xff]
    %v66 = vld [vmem:[#allocation5 + $0x90] sm:$0xff]
    %v67 = vld [vmem:[#allocation5 + $0x98] sm:$0xff]
    %v68 = vld [vmem:[#allocation5 + $0xa0] sm:$0xff]
    %v69 = vld [vmem:[#allocation5 + $0xa8] sm:$0xff]
    %v70 = vld [vmem:[#allocation5 + $0xb0] sm:$0xff]
    %v71 = vld [vmem:[#allocation5 + $0xb8] sm:$0xff]
    %v72 = vld [vmem:[#allocation5 + $0xc0] sm:$0xff]
    %v73 = vld [vmem:[#allocation5 + $0xc8] sm:$0xff]
    %v74 = vld [vmem:[#allocation5 + $0xd0] sm:$0xff]
    %v75 = vld [vmem:[#allocation5 + $0xd8] sm:$0xff]
    %v76 = vld [vmem:[#allocation5 + $0xe0] sm:$0xff]
    %v77 = vld [vmem:[#allocation5 + $0xe8] sm:$0xff]
    %v78 = vld [vmem:[#allocation5 + $0xf0] sm:$0xff]
    %v79 = vld [vmem:[#allocation5 + $0xf8] sm:$0xff]
    %v80 = vld [vmem:[%s2] sm:$0x3]
    %v82 = vlaneseq
    %v83 = vshrl.u32 %v82, 7
    %v84 = vsub.s32 0, %v83
    %v85 = vrot.slane %v80, %v84
    %v86 = vlaneseq
    %v87 = vshrl.u32 %v86, 7
    %v88 = vsub.s32 1, %v87
    %v89 = vrot.slane %v80, %v88
    %92 = vmatprep.subr.mxu0 %v79
    %93 = vmatpush1.msra.mxu0 %v78
    %94 = vmatprep.subr.mxu0 %v77
    %95 = vmatpush1.msra.mxu0 %v76
    %96 = vmatprep.subr.mxu0 %v75
    %97 = vmatpush1.msra.mxu0 %v74
    %98 = vmatprep.subr.mxu0 %v73
    %99 = vmatpush1.msra.mxu0 %v72
    %100 = vmatprep.subr.mxu0 %v71
    %101 = vmatpush1.msra.mxu0 %v70
    %102 = vmatprep.subr.mxu0 %v69
    %103 = vmatpush1.msra.mxu0 %v68
    %104 = vmatprep.subr.mxu0 %v67
    %105 = vmatpush1.msra.mxu0 %v66
    %106 = vmatprep.subr.mxu0 %v65
    %107 = vmatpush1.msra.mxu0 %v64
    %108 = vmatprep.subr.mxu0 %v63
    %109 = vmatpush1.msra.mxu0 %v62
    %110 = vmatprep.subr.mxu0 %v61
    %111 = vmatpush1.msra.mxu0 %v60
    %112 = vmatprep.subr.mxu0 %v59
    %113 = vmatpush1.msra.mxu0 %v58
    %114 = vmatprep.subr.mxu0 %v57
    %115 = vmatpush1.msra.mxu0 %v56
    %116 = vmatprep.subr.mxu0 %v55
    %117 = vmatpush1.msra.mxu0 %v54
    %118 = vmatprep.subr.mxu0 %v53
    %119 = vmatpush1.msra.mxu0 %v52
    %120 = vmatprep.subr.mxu0 %v51
    %121 = vmatpush1.msra.mxu0 %v50
    %122 = vmatprep.subr.mxu0 %v49
    %123 = vmatpush1.msra.mxu0 %v48
    %124 = vmatprep.subr.mxu0 0.0
    %125 = vmatpush2.msra.mxu0 0.0
    %126 = vmatprep.subr.mxu0 0.0
    %127 = vmatpush2.msra.mxu0 0.0
    %128 = vmatprep.subr.mxu0 0.0
    %129 = vmatpush2.msra.mxu0 0.0
    %130 = vmatprep.subr.mxu0 0.0
    %131 = vmatpush2.msra.mxu0 0.0
    %132 = vmatprep.subr.mxu0 0.0
    %133 = vmatpush2.msra.mxu0 0.0
    %134 = vmatprep.subr.mxu0 0.0
    %135 = vmatpush2.msra.mxu0 0.0
    %136 = vmatprep.subr.mxu0 0.0
    %137 = vmatpush2.msra.mxu0 0.0
    %138 = vmatprep.subr.mxu0 0.0
    %139 = vmatpush2.msra.mxu0 0.0
    %140 = vmatprep.subr.mxu0 0.0
    %141 = vmatpush2.msra.mxu0 0.0
    %142 = vmatprep.subr.mxu0 0.0
    %143 = vmatpush2.msra.mxu0 0.0
    %144 = vmatprep.subr.mxu0 0.0
    %145 = vmatpush2.msra.mxu0 0.0
    %146 = vmatprep.subr.mxu0 0.0
    %147 = vmatpush2.msra.mxu0 0.0
    %148 = vmatprep.subr.mxu0 0.0
    %149 = vmatpush2.msra.mxu0 0.0
    %150 = vmatprep.subr.mxu0 0.0
    %151 = vmatpush2.msra.mxu0 0.0
    %152 = vmatprep.subr.mxu0 0.0
    %153 = vmatpush2.msra.mxu0 0.0
    %154 = vmatprep.subr.mxu0 0.0
    %155 = vmatpush2.msra.mxu0 0.0
    %156 = vmatprep.mubr.f32.mxu0 0.0
    %157 = vmatmul.mubr.f32.gmra.mxu0 %v47
    %v158 = vpop.f32.mrf.mxu0
    %v159 = vadd.f32 %v85, %v158
    %v160 = vpop.f32.mrf.mxu0
    %v161 = vadd.f32 %v89, %v160
    %162 = vdwg.mxu0
    %v163 = vlaneseq
    %v164 = vand.u32 %v163, 127
    %vm165 = vcmp.lt.s32.totalorder %v164, 64
    %166 = vadd.xlane.f32.xlu0 %v159
    %v167 = vpop.xlane.xlu0 %166
    %v168 = vsel %vm165, %v159, 0.0
    %169 = vadd.xlane.f32.xlu0 %v168
    %v170 = vpop.xlane.xlu0 %169
    %v171 = vsub.f32 %v167, %v170
    %v172 = vmul.f32 %v159, %v159
    %173 = vadd.xlane.f32.xlu0 %v172
    %v174 = vpop.xlane.xlu0 %173
    %v175 = vsel %vm165, %v172, 0.0
    %176 = vadd.xlane.f32.xlu0 %v175
    %v177 = vpop.xlane.xlu0 %176
    %v178 = vsub.f32 %v174, %v177
    %v179 = vsel %vm165, %v170, %v171
    %v180 = vmul.f32 %v179, 0.015625
    %v181 = vsel %vm165, %v177, %v178
    %v182 = vmul.f32 %v181, 0.015625
    %v183 = vmul.f32 %v180, %v180
    %v184 = vsub.f32 %v182, %v183
    %v185 = vsub.f32 %v159, %v180
    %v186 = vadd.f32 %v184, 1e-05
    %v187 = vrsqrt.pop %v186
    %v188 = vmul.f32 %v185, %v187
    %v189 = vld [vmem:[%s3] sm:$0x1]
    %v191 = vlaneseq
    %v192 = vshrl.u32 %v191, 7
    %v193 = vsub.s32 0, %v192
    %v194 = vrot.slane %v189, %v193
    %v196 = vmul.f32 %v188, %v194
    %v197 = vld [vmem:[%s4] sm:$0x1]
    %v199 = vlaneseq
    %v200 = vshrl.u32 %v199, 7
    %v201 = vsub.s32 0, %v200
    %v202 = vrot.slane %v197, %v201
    %v204 = vadd.f32 %v196, %v202
    %v205 = vmax.f32 %v204, 0.0
    %v206 = vadd.f32 %v205, %v161
    %207 = vst [vmem:[#allocation7] sm:$0xff] %v206
    // Predicated region
    $region30: #{tpu_custom_call.1} parent=1 // pred_check
      _
    $region31: #{tpu_custom_call.1} parent=1 // pred_check_branch
      %209 = sbr.rel (0) target = $region33
    $region32: #{tpu_custom_call.1} parent=1 // pred_region
      %s211 = ssub.s32 128, 128
      %212 = vsyncadd [#allocation4], %s211
      %s214 = sshll.u32 [#allocation7], 4
      %s215 = int_to_ptr.vmem [resolvable:$true] %s214
      %217 = dma.vmem_to_hbm [thread:$0]  %s215, 128, %s5, [#allocation4]
    $region33: #{tpu_custom_call.1} parent=1 // pred_fallthru
      _
    // Predicated region
    $region34: #{tpu_custom_call.1} parent=1 // pred_check
      _
    $region35: #{tpu_custom_call.1} parent=1 // pred_check_branch
      %219 = sbr.rel (0) target = $region37
    $region36: #{tpu_custom_call.1} parent=1 // pred_region
      %220 = dma.done [#allocation4], 128
    $region37: #{tpu_custom_call.1} parent=1 // pred_fallthru
      _
    %221 = vsyncpa [#allocation3], 1
    %222 = vsyncpa [#allocation6], 1
    %223 = vsyncpa [#allocation4], 1

</llo_original>
